<compile_context>
chip_gen: v6e
topology: v6e:2x2x1
jax: 0.10.0
libtpu: 0.0.40
codegen_flags: <defaults>
</compile_context>

<pallas_src>
import jax
import jax.numpy as jnp
from jax.experimental import pallas as pl
from jax.experimental.pallas import tpu as pltpu

_LANES = 128


def _sumsq_kernel(x_ref, acc_ref):
    # Accumulate elementwise squares into a single VMEM-resident block.
    @pl.when(pl.program_id(0) == 0)
    def _():
        acc_ref[...] = jnp.zeros_like(acc_ref)

    x = x_ref[...].astype(jnp.float32)
    acc_ref[...] += x * x


def _scale_kernel(s_ref, x_ref, o_ref):
    # s_ref is a (1,1) f32 scalar in SMEM; broadcast-multiply the tile.
    scale = s_ref[0, 0]
    o_ref[...] = (x_ref[...].astype(jnp.float32) * scale).astype(o_ref.dtype)


def l2proj(x, tile_rows=512):
    """Pallas implementation of L2Proj.forward (global-norm projection)."""
    orig_shape = x.shape
    dtype = x.dtype
    total = int(x.size)

    # Lane-dense 2D layout: [M, 128], zero padded (zeros do not affect the norm).
    m_raw = max(1, -(-total // _LANES))
    m8 = -(-m_raw // 8) * 8                      # sublane-aligned row count
    if m8 <= tile_rows:
        tm = m8
        m = m8
    else:
        tm = tile_rows
        m = -(-m_raw // tm) * tm
    num_tiles = m // tm
    pad = m * _LANES - total

    xf = jnp.ravel(x)
    if pad:
        xf = jnp.pad(xf, (0, pad))
    x2 = xf.reshape(m, _LANES)

    # ---- Pass 1: sum of squares (reduction accumulator across the grid) ----
    partials = pl.pallas_call(
        _sumsq_kernel,
        out_shape=jax.ShapeDtypeStruct((tm, _LANES), jnp.float32),
        grid=(num_tiles,),
        in_specs=[pl.BlockSpec((tm, _LANES), lambda i: (i, 0))],
        out_specs=pl.BlockSpec((tm, _LANES), lambda i: (0, 0)),
        compiler_params=pltpu.CompilerParams(
            dimension_semantics=("arbitrary",)),
    )(x2)

    # Tiny glue in XLA: fold the partial tile to the global norm and the scale.
    sumsq = jnp.sum(partials)
    norm = jnp.sqrt(sumsq)
    # Branch-free version of: if norm > 1: x / norm else: x
    scale = (1.0 / jnp.maximum(norm, 1.0)).astype(jnp.float32).reshape(1, 1)

    # ---- Pass 2: scale the tensor (independent tiles, megacore-parallel) ----
    y2 = pl.pallas_call(
        _scale_kernel,
        out_shape=jax.ShapeDtypeStruct((m, _LANES), dtype),
        grid=(num_tiles,),
        in_specs=[
            pl.BlockSpec(memory_space=pltpu.MemorySpace.SMEM),   # scale scalar
            pl.BlockSpec((tm, _LANES), lambda i: (i, 0)),        # x tiles
        ],
        out_specs=pl.BlockSpec((tm, _LANES), lambda i: (i, 0)),
        compiler_params=pltpu.CompilerParams(
            dimension_semantics=("parallel",)),
    )(scale, x2)

    return y2.reshape(-1)[:total].reshape(orig_shape)


def l2proj_reference(x):
    n = jnp.linalg.norm(x)
    return x / jnp.maximum(n, 1.0)


if __name__ == "__main__":
    key = jax.random.PRNGKey(0)
    # Small example consistent with the module (any-shaped tensor).
    x = jax.random.normal(key, (2, 4, 16, 16), jnp.float32)  # ||x|| >> 1 branch

    out = l2proj(x)
    jax.block_until_ready(out)
    ref = l2proj_reference(x)
    assert out.shape == x.shape
    assert jnp.allclose(out, ref, atol=1e-5, rtol=1e-5), "mismatch (scaled branch)"

    # ||x|| <= 1 branch: module is the identity.
    x_small = x * 1e-3
    out_small = l2proj(x_small)
    jax.block_until_ready(out_small)
    assert jnp.allclose(out_small, l2proj_reference(x_small), atol=1e-7, rtol=1e-7), \
        "mismatch (identity branch)"

    print("KERNEL_OK")
</pallas_src>

<mosaic_0001>
module attributes {stable_mosaic.version = 11 : i64} {
  func.func @_sumsq_kernel(%arg0: i32, %arg1: memref<16x128xf32, #tpu.memory_space<vmem>>, %arg2: memref<16x128xf32, #tpu.memory_space<vmem>>) attributes {dimension_semantics = [#tpu.dimension_semantics<arbitrary>], iteration_bounds = array<i64: 1>, scalar_prefetch = 0 : i64, scratch_operands = 0 : i64, tpu.core_type = #tpu.core_type<tc>, window_params = [{transform_indices = @transform_0, window_bounds = array<i64: 16, 128>}, {pipeline_mode = #tpu.pipeline_mode<synchronous>, transform_indices = @transform_1, window_bounds = array<i64: 16, 128>}]} {
    %c0_i32 = arith.constant 0 : i32
    %0 = arith.cmpi eq, %arg0, %c0_i32 : i32
    %1 = arith.extui %0 : i1 to i32
    %c0_i32_0 = arith.constant 0 : i32
    %2 = arith.cmpi ne, %1, %c0_i32_0 : i32
    scf.if %2 {
      %cst = arith.constant 0.000000e+00 : f32
      %8 = vector.broadcast %cst : f32 to vector<16x128xf32>
      %c0_6 = arith.constant 0 : index
      %c0_7 = arith.constant 0 : index
      %9 = vector.load %arg2[%c0_6, %c0_7] : memref<16x128xf32, #tpu.memory_space<vmem>>, vector<16x128xf32>
      tpu.vector_store %arg2[%c0_6, %c0_7], %8 {strides = array<i32>} : memref<16x128xf32, #tpu.memory_space<vmem>>, vector<16x128xf32>,
    } else {
    }
    %c0 = arith.constant 0 : index
    %c0_1 = arith.constant 0 : index
    %3 = vector.load %arg1[%c0, %c0_1] : memref<16x128xf32, #tpu.memory_space<vmem>>, vector<16x128xf32>
    %c0_2 = arith.constant 0 : index
    %c0_3 = arith.constant 0 : index
    %4 = vector.load %arg2[%c0_2, %c0_3] : memref<16x128xf32, #tpu.memory_space<vmem>>, vector<16x128xf32>
    %5 = arith.mulf %3, %3 : vector<16x128xf32>
    %6 = arith.addf %4, %5 : vector<16x128xf32>
    %c0_4 = arith.constant 0 : index
    %c0_5 = arith.constant 0 : index
    %7 = vector.load %arg2[%c0_4, %c0_5] : memref<16x128xf32, #tpu.memory_space<vmem>>, vector<16x128xf32>
    tpu.vector_store %arg2[%c0_4, %c0_5], %6 {strides = array<i32>} : memref<16x128xf32, #tpu.memory_space<vmem>>, vector<16x128xf32>,
    return
  }
  func.func @transform_0(%arg0: i32) -> (i32, i32) {
    %c0_i32 = arith.constant 0 : i32
    %c0_i32_0 = arith.constant 0 : i32
    return %arg0, %c0_i32 : i32, i32
  }
  func.func @transform_1(%arg0: i32) -> (i32, i32) {
    %c0_i32 = arith.constant 0 : i32
    %c0_i32_0 = arith.constant 0 : i32
    %c0_i32_1 = arith.constant 0 : i32
    return %c0_i32, %c0_i32_0 : i32, i32
  }
}

</mosaic_0001>

<llo_original>
// kernel: tpu_custom_call.1
$region0: #{tpu_custom_call.1}
  #allocation0 [shape = 'u32[]', space=smem, size = 0x4, offset = 0x4, fixed_abs, tag = 'smem constant byte address 0x4 - core index']
  #allocation1 [shape = 'u32[144,128]{1,0:T(1,128)}', space=vmem, size = 0x12000, scoped, tag = 'internal scratch']
  %s0 = inlined_call_operand.hbm [shape: f32[16,128], index: 0, kind: input, shape index: {}]
  %s1 = inlined_call_operand.hbm [shape: f32[16,128], index: 1, kind: output, shape index: {}]
  %s2 = sld [smem:[#allocation0]]
  $region22: #{tpu_custom_call.1} parent=0
    _
  %s4 = ssub.s32 1, %s2
  %s5 = scalar_select 0, %s4, %s2
  $region1: #{tpu_custom_call.1} parent=0
    #allocation2 [shape = 'u8[8192]{0}', space=vmem, size = 0x2000, scoped, tag = 'input window, operand 0, single buffered']
    #allocation3 [shape = 's32[1]{0}', space=sflag, size = 0x4, scoped, tag = 'scoped memory for tpu_custom_call.1']
    #allocation4 [shape = 's32[1]{0}', space=sflag, size = 0x4, scoped, tag = 'scoped memory for tpu_custom_call.1']
    #allocation5 [shape = 'u8[8192]{0}', space=vmem, size = 0x2000, scoped, tag = 'output window, operand 0, single buffered']
    %6 = vsyncpa [#allocation3], 0
    %7 = vsyncpa [#allocation4], 0
    // Predicated region
    $region2: #{tpu_custom_call.1} parent=1 // pred_check
      _
    $region3: #{tpu_custom_call.1} parent=1 // pred_check_branch
      %9 = sbr.rel (0) target = $region5
    $region4: #{tpu_custom_call.1} parent=1 // pred_region
      %s11 = ssub.s32 256, 256
      %12 = vsyncadd [#allocation3], %s11
      %s13 = sshll.u32 [#allocation2], 4
      %s14 = int_to_ptr.vmem [resolvable:$true] %s13
      %19 = dma.hbm_to_vmem [thread:$0]  %s0, 256, %s14, [#allocation3], 128, 128, 8
    $region5: #{tpu_custom_call.1} parent=1 // pred_fallthru
      _
    // Predicated region
    $region6: #{tpu_custom_call.1} parent=1 // pred_check
      _
    $region7: #{tpu_custom_call.1} parent=1 // pred_check_branch
      %21 = sbr.rel (0) target = $region9
    $region8: #{tpu_custom_call.1} parent=1 // pred_region
      %22 = dma.done [#allocation3], 256
    $region9: #{tpu_custom_call.1} parent=1 // pred_fallthru
      _
    %p23 = scmp.eq.s32.totalorder 0, 0
    // Predicated region
    $region10: #{tpu_custom_call.1} parent=1 // pred_check
      %p24 = pneg %p23
    $region11: #{tpu_custom_call.1} parent=1 // pred_check_branch
      %26 = sbr.rel (%p24) target = $region13
    $region12: #{tpu_custom_call.1} parent=1 // pred_region
      %27 = vst [vmem:[#allocation5] sm:$0xff] 0.0
      %28 = vst [vmem:[#allocation5 + $0x8] sm:$0xff] 0.0
    $region13: #{tpu_custom_call.1} parent=1 // pred_fallthru
      _
    %v29 = vld [vmem:[#allocation2] sm:$0xff]
    %v30 = vld [vmem:[#allocation2 + $0x8] sm:$0xff]
    %v31 = vld [vmem:[#allocation5] sm:$0xff]
    %v32 = vld [vmem:[#allocation5 + $0x8] sm:$0xff]
    %v33 = vmul.f32 %v29, %v29
    %v34 = vmul.f32 %v30, %v30
    %v35 = vadd.f32 %v31, %v33
    %v36 = vadd.f32 %v32, %v34
    %37 = vst [vmem:[#allocation5] sm:$0xff] %v35
    %38 = vst [vmem:[#allocation5 + $0x8] sm:$0xff] %v36
    // Predicated region
    $region14: #{tpu_custom_call.1} parent=1 // pred_check
      _
    $region15: #{tpu_custom_call.1} parent=1 // pred_check_branch
      %40 = sbr.rel (0) target = $region17
    $region16: #{tpu_custom_call.1} parent=1 // pred_region
      %s42 = ssub.s32 256, 256
      %43 = vsyncadd [#allocation4], %s42
      %s44 = sshll.u32 [#allocation5], 4
      %s45 = int_to_ptr.vmem [resolvable:$true] %s44
      %50 = dma.vmem_to_hbm [thread:$0]  %s45, 256, %s1, [#allocation4], 128, 128, 8
    $region17: #{tpu_custom_call.1} parent=1 // pred_fallthru
      _
    // Predicated region
    $region18: #{tpu_custom_call.1} parent=1 // pred_check
      _
    $region19: #{tpu_custom_call.1} parent=1 // pred_check_branch
      %52 = sbr.rel (0) target = $region21
    $region20: #{tpu_custom_call.1} parent=1 // pred_region
      %53 = dma.done [#allocation4], 256
    $region21: #{tpu_custom_call.1} parent=1 // pred_fallthru
      _
    %54 = vsyncpa [#allocation3], 1
    %55 = vsyncpa [#allocation4], 1

</llo_original>
